<compile_context>
chip_gen: v7x
topology: tpu7x:2x2x1
jax: 0.10.0
libtpu: 0.0.40
codegen_flags: <defaults>
</compile_context>

<pallas_src>
import functools

import jax
import jax.numpy as jnp
from jax.experimental import pallas as pl
from jax.experimental.pallas import tpu as pltpu

_LANE = 128


def _round_up(x, m):
    return ((x + m - 1) // m) * m


def _fused_mlp_kernel(*refs, n_layers, apply_mask, out_features):
    """Fused MLP on one (TM, F) row block.

    refs layout:
      x_ref (TM, F) bf16, [m_ref (TM, 1) int32],
      w0 (K0, N0p) bf16, b0 (1, N0p) f32, w1, b1, ..., o_ref (TM, OUT) f32
    """
    if apply_mask:
        x_ref, m_ref = refs[0], refs[1]
        wb = refs[2:-1]
    else:
        x_ref = refs[0]
        wb = refs[1:-1]
    o_ref = refs[-1]

    y = x_ref[...]  # bf16 row block
    if apply_mask:
        # keep = 1.0 for real tiles, 0.0 for padded tiles.  Multiplying the
        # sigmoid output by keep is exactly masked_fill(-inf) + sigmoid,
        # since sigmoid(-inf) == 0.
        keep = (m_ref[...] == 0).astype(jnp.float32)  # (TM, 1)

    for li in range(n_layers):
        w = wb[2 * li][...]       # bf16 (K, Np)
        b = wb[2 * li + 1][...]   # f32  (1, Np)
        # bf16 MXU matmul with f32 accumulation; elementwise stays f32.
        y = jnp.dot(y.astype(jnp.bfloat16), w,
                    preferred_element_type=jnp.float32) + b
        if li < n_layers - 1:
            y = jax.nn.sigmoid(y)
            if apply_mask:
                y = y * keep
        # Zero-padded lanes of the hidden activation hold sigmoid(0) = 0.5,
        # but the next layer's padded weight has zero rows at those K
        # positions, so they contribute nothing (padding is numerically exact).

    # Only the first `out_features` lanes are real; store them unpadded.
    o_ref[...] = y[:, :out_features].astype(o_ref.dtype)


def prepare_tiles_mlp_params(params):
    """One-time prep (outside the per-call path): pad every layer's output (N)
    dim to a multiple of 128 lanes and cast weights to bf16.  The contraction
    dim of layer 0 (the streamed x features) is left unpadded; padded K rows of
    later layers are zero, which exactly cancels the sigmoid(0)=0.5 values in
    padded hidden lanes.

    params: list of (W, b) with W of shape (K, N) (== PyTorch weight.T).
    """
    n_layers = len(params)
    in_features = params[0][0].shape[0]
    out_features = params[-1][0].shape[1]
    dims = [in_features] + [w.shape[1] for w, _ in params]
    pdims = [dims[0]] + [_round_up(d, _LANE) for d in dims[1:]]

    flat_wb = []
    for li, (w, b) in enumerate(params):
        kp, np_ = pdims[li], pdims[li + 1]
        b2 = jnp.asarray(b).reshape(1, -1)
        wp = jnp.zeros((kp, np_), jnp.bfloat16)
        wp = wp.at[: w.shape[0], : w.shape[1]].set(jnp.asarray(w, jnp.bfloat16))
        bp = jnp.zeros((1, np_), jnp.float32)
        bp = bp.at[:, : b2.shape[1]].set(jnp.asarray(b2, jnp.float32))
        flat_wb += [wp, bp]

    weight_bytes = sum(int(a.size) * a.dtype.itemsize for a in flat_wb)
    return {
        "flat_wb": flat_wb,
        "pdims": pdims,
        "n_layers": n_layers,
        "in_features": in_features,
        "out_features": out_features,
        "weight_bytes": weight_bytes,
    }


def _row_tile(R, tm):
    """Largest row tile: multiple of 16 (bf16 sublane packing), <= R when
    R >= 16 so the ragged last block is handled by Pallas boundary masking."""
    tm = max(16, (tm // 16) * 16)
    if R >= 16:
        return min(tm, (R // 16) * 16)
    return _round_up(R, 8)


def tiles_mlp_forward(x, mask, prepared, *, tm=1024):
    """x: (B, N_TILES, IN_FEATURES); mask: (B, N_TILES) bool (True == padded)
    or None; prepared: output of prepare_tiles_mlp_params.
    Returns (B, N_TILES, OUT_FEATURES) float32."""
    B, NT, F = x.shape
    assert F == prepared["in_features"]
    R = B * NT
    pdims = prepared["pdims"]
    n_layers = prepared["n_layers"]
    out_features = prepared["out_features"]
    flat_wb = prepared["flat_wb"]

    # Streamed x read in bf16 (no-op if the caller already provides bf16).
    x2d = x.reshape(R, F)
    if x2d.dtype != jnp.bfloat16:
        x2d = x2d.astype(jnp.bfloat16)

    apply_mask = mask is not None
    operands = [x2d]
    if apply_mask:
        operands.append(mask.reshape(R, 1).astype(jnp.int32))
    operands += flat_wb

    # ---- VMEM budget & row tile --------------------------------------------
    try:
        vmem_cap = int(pltpu.get_tpu_info().vmem_capacity_bytes)
    except Exception:
        vmem_cap = 64 * 1024 * 1024  # conservative fallback (v7x per-TC size)
    vmem_budget = int(min(max(0.8 * vmem_cap, 32 * 1024 * 1024),
                          104 * 1024 * 1024))

    tm_eff = _row_tile(R, tm)

    def _vmem_estimate(t):
        stream = 2 * t * F * 2                       # x, double-buffered bf16
        stream += 2 * t * out_features * 4           # output, double-buffered
        if apply_mask:
            stream += 2 * t * 4                      # mask block
        acts = 6 * t * max(pdims) * 4                # f32 acts + bf16 copy + slack
        return prepared["weight_bytes"] + stream + acts

    while tm_eff > 16 and _vmem_estimate(tm_eff) > vmem_budget:
        tm_eff = max(16, _round_up(tm_eff // 2, 16))

    grid = (pl.cdiv(R, tm_eff),)

    # ---- specs ---------------------------------------------------------------
    in_specs = [pl.BlockSpec((tm_eff, F), lambda i: (i, 0))]          # x rows
    if apply_mask:
        in_specs.append(pl.BlockSpec((tm_eff, 1), lambda i: (i, 0)))  # mask rows
    for li in range(n_layers):
        wp, bp = flat_wb[2 * li], flat_wb[2 * li + 1]
        # constant index_map -> weights/biases resident in VMEM across steps
        in_specs.append(pl.BlockSpec(wp.shape, lambda i: (0, 0)))
        in_specs.append(pl.BlockSpec(bp.shape, lambda i: (0, 0)))
    out_spec = pl.BlockSpec((tm_eff, out_features), lambda i: (i, 0))

    # ---- advisory cost estimate ---------------------------------------------
    flops = 2 * R * sum(pdims[i] * pdims[i + 1] for i in range(n_layers))
    transcendentals = R * sum(pdims[1:-1])
    bytes_accessed = (R * F * 2 + R * out_features * 4
                      + (R * 4 if apply_mask else 0)
                      + prepared["weight_bytes"])
    cost = pl.CostEstimate(flops=int(flops),
                           transcendentals=int(transcendentals),
                           bytes_accessed=int(bytes_accessed))

    kernel = functools.partial(
        _fused_mlp_kernel,
        n_layers=n_layers,
        apply_mask=apply_mask,
        out_features=out_features,
    )

    out = pl.pallas_call(
        kernel,
        out_shape=jax.ShapeDtypeStruct((R, out_features), jnp.float32),
        grid_spec=pltpu.PrefetchScalarGridSpec(
            num_scalar_prefetch=0,
            grid=grid,
            in_specs=in_specs,
            out_specs=out_spec,
        ),
        compiler_params=pltpu.CompilerParams(
            dimension_semantics=("parallel",),
            vmem_limit_bytes=vmem_budget,
        ),
        cost_estimate=cost,
    )(*operands)

    return out.reshape(B, NT, out_features)


def init_tiles_mlp_params(key, in_features, hidden, out_features):
    """Deterministic init mirroring nn.Linear shapes (weights stored as (K, N))."""
    params = []
    feats = in_features
    sizes = list(hidden) + [out_features]
    for h in sizes:
        key, kw, kb = jax.random.split(key, 3)
        bound = 1.0 / jnp.sqrt(feats)
        w = jax.random.uniform(kw, (feats, h), jnp.float32, -bound, bound)
        b = jax.random.uniform(kb, (1, h), jnp.float32, -bound, bound)
        params.append((w, b))
        feats = h
    return params


def _reference_forward(x, mask, params):
    """Pure-JAX f32 reference mirroring the PyTorch module."""
    n_layers = len(params)
    y = x
    for li, (w, b) in enumerate(params):
        is_last = li == n_layers - 1
        y = jnp.einsum("bnf,fh->bnh", y, w) + b[0]
        if not is_last:
            if mask is not None:
                y = jnp.where(mask[..., None], -jnp.inf, y)
            y = jax.nn.sigmoid(y)
    return y


if __name__ == "__main__":
    key = jax.random.PRNGKey(0)
    k_x, k_p, k_x2, k_p2 = jax.random.split(key, 4)

    # ---- config 1: small shapes from the module docstring --------------------
    B, N_TILES, IN_FEATURES = 2, 8, 16
    HIDDEN = [32]
    OUT_FEATURES = 1

    x = jax.random.normal(k_x, (B, N_TILES, IN_FEATURES), jnp.float32)
    # True == padded tile (last tiles of each slide are padding)
    mask = jnp.arange(N_TILES)[None, :] >= jnp.array([6, 5])[:, None]

    params = init_tiles_mlp_params(k_p, IN_FEATURES, HIDDEN, OUT_FEATURES)
    prepared = prepare_tiles_mlp_params(params)  # one-time weight prep

    out = jax.block_until_ready(tiles_mlp_forward(x, mask, prepared))
    ref = _reference_forward(x, mask, params)
    assert out.shape == (B, N_TILES, OUT_FEATURES)
    # bf16 matmul inputs -> relaxed tolerance vs the f32 reference
    assert jnp.allclose(out, ref, atol=2e-2, rtol=2e-2), (
        f"max abs err {float(jnp.max(jnp.abs(out - ref)))}")

    # mask=None path (mask operand and its DMA are dropped entirely)
    out_nm = jax.block_until_ready(tiles_mlp_forward(x, None, prepared))
    ref_nm = _reference_forward(x, None, params)
    assert jnp.allclose(out_nm, ref_nm, atol=2e-2, rtol=2e-2)

    # ---- config 2: ragged row count (R=42), two hidden layers, OUT=3 ---------
    B2, NT2, F2, H2, O2 = 3, 14, 24, [48, 40], 3
    x2 = jax.random.normal(k_x2, (B2, NT2, F2), jnp.float32)
    lens = jnp.array([14, 9, 5])
    mask2 = jnp.arange(NT2)[None, :] >= lens[:, None]
    params2 = init_tiles_mlp_params(k_p2, F2, H2, O2)
    prepared2 = prepare_tiles_mlp_params(params2)
    out2 = jax.block_until_ready(tiles_mlp_forward(x2, mask2, prepared2))
    ref2 = _reference_forward(x2, mask2, params2)
    assert out2.shape == (B2, NT2, O2)
    assert jnp.allclose(out2, ref2, atol=2e-2, rtol=2e-2), (
        f"max abs err {float(jnp.max(jnp.abs(out2 - ref2)))}")

    print("KERNEL_OK")
</pallas_src>

<mosaic_0001>
module attributes {stable_mosaic.version = 11 : i64} {
  func.func @_fused_mlp_kernel(%arg0: i32, %arg1: memref<16x16xbf16, #tpu.memory_space<vmem>>, %arg2: memref<16x1xi32, #tpu.memory_space<vmem>>, %arg3: memref<16x128xbf16, #tpu.memory_space<vmem>>, %arg4: memref<1x128xf32, #tpu.memory_space<vmem>>, %arg5: memref<128x128xbf16, #tpu.memory_space<vmem>>, %arg6: memref<1x128xf32, #tpu.memory_space<vmem>>, %arg7: memref<16x1xf32, #tpu.memory_space<vmem>>) attributes {dimension_semantics = [#tpu.dimension_semantics<parallel>], iteration_bounds = array<i64: 1>, scalar_prefetch = 0 : i64, scratch_operands = 0 : i64, tpu.core_type = #tpu.core_type<tc>, window_params = [{transform_indices = @transform_0, window_bounds = array<i64: 16, 16>}, {transform_indices = @transform_1, window_bounds = array<i64: 16, 1>}, {pipeline_mode = #tpu.pipeline_mode<synchronous>, transform_indices = @transform_2, window_bounds = array<i64: 16, 128>}, {pipeline_mode = #tpu.pipeline_mode<synchronous>, transform_indices = @transform_3, window_bounds = array<i64: 1, 128>}, {pipeline_mode = #tpu.pipeline_mode<synchronous>, transform_indices = @transform_4, window_bounds = array<i64: 128, 128>}, {pipeline_mode = #tpu.pipeline_mode<synchronous>, transform_indices = @transform_5, window_bounds = array<i64: 1, 128>}, {transform_indices = @transform_6, window_bounds = array<i64: 16, 1>}]} {
    %c0 = arith.constant 0 : index
    %c0_0 = arith.constant 0 : index
    %0 = vector.load %arg1[%c0, %c0_0] : memref<16x16xbf16, #tpu.memory_space<vmem>>, vector<16x16xbf16>
    %c0_1 = arith.constant 0 : index
    %c0_2 = arith.constant 0 : index
    %1 = vector.load %arg2[%c0_1, %c0_2] : memref<16x1xi32, #tpu.memory_space<vmem>>, vector<16x1xi32>
    %c0_i32 = arith.constant 0 : i32
    %2 = vector.broadcast %c0_i32 : i32 to vector<16x1xi32>
    %3 = arith.cmpi eq, %1, %2 : vector<16x1xi32>
    %4 = arith.extui %3 : vector<16x1xi1> to vector<16x1xi32>
    %5 = arith.sitofp %4 : vector<16x1xi32> to vector<16x1xf32>
    %c0_3 = arith.constant 0 : index
    %c0_4 = arith.constant 0 : index
    %6 = vector.load %arg3[%c0_3, %c0_4] : memref<16x128xbf16, #tpu.memory_space<vmem>>, vector<16x128xbf16>
    %c0_5 = arith.constant 0 : index
    %c0_6 = arith.constant 0 : index
    %7 = vector.load %arg4[%c0_5, %c0_6] : memref<1x128xf32, #tpu.memory_space<vmem>>, vector<1x128xf32>
    %cst = arith.constant dense<0.000000e+00> : vector<16x128xf32>
    %8 = tpu.matmul %0, %6, %cst {dimension_numbers = #tpu.dot_dimension_numbers<[1], [0], [0], [1], [0, 0, 1, 1], [], []>} : vector<16x16xbf16>, vector<16x128xbf16>, vector<16x128xf32> -> vector<16x128xf32>
    %9 = vector.broadcast %7 : vector<1x128xf32> to vector<16x128xf32>
    %10 = arith.addf %8, %9 : vector<16x128xf32>
    %11 = arith.negf %10 : vector<16x128xf32>
    %12 = math.exp %11 : vector<16x128xf32>
    %cst_7 = arith.constant 1.000000e+00 : f32
    %13 = vector.broadcast %cst_7 : f32 to vector<16x128xf32>
    %14 = arith.addf %13, %12 : vector<16x128xf32>
    %15 = arith.divf %13, %14 : vector<16x128xf32>
    %16 = vector.broadcast %5 : vector<16x1xf32> to vector<16x128xf32>
    %17 = arith.mulf %15, %16 : vector<16x128xf32>
    %c0_8 = arith.constant 0 : index
    %c0_9 = arith.constant 0 : index
    %18 = vector.load %arg5[%c0_8, %c0_9] : memref<128x128xbf16, #tpu.memory_space<vmem>>, vector<128x128xbf16>
    %c0_10 = arith.constant 0 : index
    %c0_11 = arith.constant 0 : index
    %19 = vector.load %arg6[%c0_10, %c0_11] : memref<1x128xf32, #tpu.memory_space<vmem>>, vector<1x128xf32>
    %20 = arith.truncf %17 : vector<16x128xf32> to vector<16x128xbf16>
    %cst_12 = arith.constant dense<0.000000e+00> : vector<16x128xf32>
    %21 = tpu.matmul %20, %18, %cst_12 {dimension_numbers = #tpu.dot_dimension_numbers<[1], [0], [0], [1], [0, 0, 1, 1], [], []>} : vector<16x128xbf16>, vector<128x128xbf16>, vector<16x128xf32> -> vector<16x128xf32>
    %22 = vector.broadcast %19 : vector<1x128xf32> to vector<16x128xf32>
    %23 = arith.addf %21, %22 : vector<16x128xf32>
    %24 = vector.extract_strided_slice %23 {offsets = [0, 0], sizes = [16, 1], strides = [1, 1]} : vector<16x128xf32> to vector<16x1xf32>
    %c0_13 = arith.constant 0 : index
    %c0_14 = arith.constant 0 : index
    %25 = vector.load %arg7[%c0_13, %c0_14] : memref<16x1xf32, #tpu.memory_space<vmem>>, vector<16x1xf32>
    tpu.vector_store %arg7[%c0_13, %c0_14], %24 {strides = array<i32>} : memref<16x1xf32, #tpu.memory_space<vmem>>, vector<16x1xf32>,
    return
  }
  func.func @transform_0(%arg0: i32) -> (i32, i32) {
    %c0_i32 = arith.constant 0 : i32
    %c0_i32_0 = arith.constant 0 : i32
    return %arg0, %c0_i32 : i32, i32
  }
  func.func @transform_1(%arg0: i32) -> (i32, i32) {
    %c0_i32 = arith.constant 0 : i32
    %c0_i32_0 = arith.constant 0 : i32
    return %arg0, %c0_i32 : i32, i32
  }
  func.func @transform_2(%arg0: i32) -> (i32, i32) {
    %c0_i32 = arith.constant 0 : i32
    %c0_i32_0 = arith.constant 0 : i32
    %c0_i32_1 = arith.constant 0 : i32
    return %c0_i32, %c0_i32_0 : i32, i32
  }
  func.func @transform_3(%arg0: i32) -> (i32, i32) {
    %c0_i32 = arith.constant 0 : i32
    %c0_i32_0 = arith.constant 0 : i32
    %c0_i32_1 = arith.constant 0 : i32
    return %c0_i32, %c0_i32_0 : i32, i32
  }
  func.func @transform_4(%arg0: i32) -> (i32, i32) {
    %c0_i32 = arith.constant 0 : i32
    %c0_i32_0 = arith.constant 0 : i32
    %c0_i32_1 = arith.constant 0 : i32
    return %c0_i32, %c0_i32_0 : i32, i32
  }
  func.func @transform_5(%arg0: i32) -> (i32, i32) {
    %c0_i32 = arith.constant 0 : i32
    %c0_i32_0 = arith.constant 0 : i32
    %c0_i32_1 = arith.constant 0 : i32
    return %c0_i32, %c0_i32_0 : i32, i32
  }
  func.func @transform_6(%arg0: i32) -> (i32, i32) {
    %c0_i32 = arith.constant 0 : i32
    %c0_i32_0 = arith.constant 0 : i32
    return %arg0, %c0_i32 : i32, i32
  }
}

</mosaic_0001>

<llo_original>
// kernel: tpu_custom_call.1
$region0: #{tpu_custom_call.1}
  #allocation0 [shape = 'u32[]', space=smem, size = 0x4, offset = 0x4, fixed_abs, tag = 'smem constant byte address 0x4 - core index']
  #allocation1 [shape = 'u32[144,128]{1,0:T(1,128)}', space=vmem, size = 0x12000, scoped, tag = 'internal scratch']
  %s0 = inlined_call_operand.vmem [shape: bf16[16,16], index: 0, kind: input, shape index: {}]
  %s1 = inlined_call_operand.vmem [shape: s32[16,1], index: 1, kind: input, shape index: {}]
  %s2 = inlined_call_operand.vmem [shape: bf16[16,128], index: 2, kind: input, shape index: {}]
  %s3 = inlined_call_operand.vmem [shape: f32[1,128], index: 3, kind: input, shape index: {}]
  %s4 = inlined_call_operand.hbm [shape: bf16[128,128], index: 4, kind: input, shape index: {}]
  %s5 = inlined_call_operand.vmem [shape: f32[1,128], index: 5, kind: input, shape index: {}]
  %s6 = inlined_call_operand.vmem [shape: f32[16,1], index: 6, kind: output, shape index: {}]
  %s7 = sld [smem:[#allocation0]]
  $region38: #{tpu_custom_call.1} parent=0
    _
  %s9 = ssub.s32 1, %s7
  %s10 = scalar_select 0, %s9, %s7
  $region1: #{tpu_custom_call.1} parent=0
    #allocation2 [shape = 'u8[32768]{0}', space=vmem, size = 0x8000, scoped, tag = 'input window, operand 4, single buffered']
    #allocation3 [shape = 's32[1]{0}', space=sflag, size = 0x4, scoped, tag = 'scoped memory for tpu_custom_call.1']
    %11 = vsyncpa [#allocation3], 0
    // Predicated region
    $region2: #{tpu_custom_call.1} parent=1 // pred_check
      _
    $region3: #{tpu_custom_call.1} parent=1 // pred_check_branch
      %13 = sbr.rel (0) target = $region5
    $region4: #{tpu_custom_call.1} parent=1 // pred_region
      _
    $region5: #{tpu_custom_call.1} parent=1 // pred_fallthru
      _
    // Predicated region
    $region6: #{tpu_custom_call.1} parent=1 // pred_check
      _
    $region7: #{tpu_custom_call.1} parent=1 // pred_check_branch
      %15 = sbr.rel (0) target = $region9
    $region8: #{tpu_custom_call.1} parent=1 // pred_region
      _
    $region9: #{tpu_custom_call.1} parent=1 // pred_fallthru
      _
    // Predicated region
    $region10: #{tpu_custom_call.1} parent=1 // pred_check
      _
    $region11: #{tpu_custom_call.1} parent=1 // pred_check_branch
      %17 = sbr.rel (0) target = $region13
    $region12: #{tpu_custom_call.1} parent=1 // pred_region
      _
    $region13: #{tpu_custom_call.1} parent=1 // pred_fallthru
      _
    // Predicated region
    $region14: #{tpu_custom_call.1} parent=1 // pred_check
      _
    $region15: #{tpu_custom_call.1} parent=1 // pred_check_branch
      %19 = sbr.rel (0) target = $region17
    $region16: #{tpu_custom_call.1} parent=1 // pred_region
      _
    $region17: #{tpu_custom_call.1} parent=1 // pred_fallthru
      _
    // Predicated region
    $region18: #{tpu_custom_call.1} parent=1 // pred_check
      _
    $region19: #{tpu_custom_call.1} parent=1 // pred_check_branch
      %21 = sbr.rel (0) target = $region21
    $region20: #{tpu_custom_call.1} parent=1 // pred_region
      %s23 = ssub.s32 1024, 1024
      %24 = vsyncadd [#allocation3], %s23
      %s25 = sshll.u32 [#allocation2], 4
      %s26 = int_to_ptr.vmem [resolvable:$true] %s25
      %31 = dma.hbm_to_vmem [thread:$0]  %s4, 1024, %s26, [#allocation3], 64, 64, 4
    $region21: #{tpu_custom_call.1} parent=1 // pred_fallthru
      _
    // Predicated region
    $region22: #{tpu_custom_call.1} parent=1 // pred_check
      _
    $region23: #{tpu_custom_call.1} parent=1 // pred_check_branch
      %33 = sbr.rel (0) target = $region25
    $region24: #{tpu_custom_call.1} parent=1 // pred_region
      _
    $region25: #{tpu_custom_call.1} parent=1 // pred_fallthru
      _
    // Predicated region
    $region26: #{tpu_custom_call.1} parent=1 // pred_check
      _
    $region27: #{tpu_custom_call.1} parent=1 // pred_check_branch
      %35 = sbr.rel (0) target = $region29
    $region28: #{tpu_custom_call.1} parent=1 // pred_region
      %36 = dma.done [#allocation3], 1024
    $region29: #{tpu_custom_call.1} parent=1 // pred_fallthru
      _
    %v38 = vld [vmem:[%s0] sm:$0xf]
    %v39 = vld [vmem:[%s0 + $0x4] sm:$0xf]
    %v40 = vld [vmem:[%s1] sm:$0xff]
    %v41 = vld [vmem:[%s1 + $0x8] sm:$0xff]
    %vm42 = vcmp.eq.s32.totalorder %v40, 0
    %vm43 = vcmp.eq.s32.totalorder %v41, 0
    %v44 = vsel %vm42, 1, 0
    %v45 = vsel %vm43, 1, 0
    %v46 = vcvt.s32.f32 %v44
    %v47 = vcvt.s32.f32 %v45
    %v48 = vld [vmem:[%s2] sm:$0xf]
    %v49 = vld [vmem:[%s2 + $0x4] sm:$0xf]
    %v50 = vld [vmem:[%s3] sm:$0x1]
    %v52 = vlaneseq
    %v53 = vshrl.u32 %v52, 7
    %v54 = vsub.s32 0, %v53
    %v55 = vrot.slane %v50, %v54
    %v59 = vunpack.c.l.b16 %v38
    %v60 = vunpack.c.l.b16 %v39
    %v61 = vpack.c.b16 %v60, %v59
    %v64 = vunpack.c.l.b16 %v48
    %v65 = vunpack.c.l.b16 %v49
    %v66 = vpack.c.b16 %v65, %v64
    %vm68 = vcmask 130048
    %v70 = vsel %vm68, %v61, 0
    %72 = vmatprep.subr.bf16.mxu0 0
    %73 = vmatpush1.bf16.msra.mxu0 %v66
    %74 = vmatprep.subr.bf16.mxu0 0
    %75 = vmatpush1.bf16.msra.mxu0 0
    %76 = vmatprep.subr.bf16.mxu0 0
    %77 = vmatpush1.bf16.msra.mxu0 0
    %78 = vmatprep.subr.bf16.mxu0 0
    %79 = vmatpush1.bf16.msra.mxu0 0
    %80 = vmatprep.subr.bf16.mxu0 0
    %81 = vmatpush1.bf16.msra.mxu0 0
    %82 = vmatprep.subr.bf16.mxu0 0
    %83 = vmatpush1.bf16.msra.mxu0 0
    %84 = vmatprep.subr.bf16.mxu0 0
    %85 = vmatpush1.bf16.msra.mxu0 0
    %86 = vmatprep.subr.bf16.mxu0 0
    %87 = vmatpush1.bf16.msra.mxu0 0
    %88 = vmatprep.subr.bf16.mxu0 0
    %89 = vmatpush1.bf16.msra.mxu0 0
    %90 = vmatprep.subr.bf16.mxu0 0
    %91 = vmatpush1.bf16.msra.mxu0 0
    %92 = vmatprep.subr.bf16.mxu0 0
    %93 = vmatpush1.bf16.msra.mxu0 0
    %94 = vmatprep.subr.bf16.mxu0 0
    %95 = vmatpush1.bf16.msra.mxu0 0
    %96 = vmatprep.subr.bf16.mxu0 0
    %97 = vmatpush1.bf16.msra.mxu0 0
    %98 = vmatprep.subr.bf16.mxu0 0
    %99 = vmatpush1.bf16.msra.mxu0 0
    %100 = vmatprep.subr.bf16.mxu0 0
    %101 = vmatpush1.bf16.msra.mxu0 0
    %102 = vmatprep.subr.bf16.mxu0 0
    %103 = vmatpush1.bf16.msra.mxu0 0
    %104 = vmatprep.mubr.bf16.mxu0 0
    %105 = vmatmul.mubr.bf16.gmra.mrb[0].mxu0 %v70
    %v106 = vpop.f32.mrb[0].mxu0
    %v107 = vadd.f32 %v55, %v106
    %v108 = vpop.f32.mrb[0].mxu0
    %v109 = vpop.f32.mrb[0].mxu0
    %v110 = vadd.f32 %v55, %v109
    %v111 = vpop.f32.mrb[0].mxu0
    %112 = vdwg.mxu0
    %v113 = vxor.u32 %v107, 2147483648
    %v114 = vxor.u32 %v110, 2147483648
    %v115 = vmul.f32 %v113, 1.442695
    %v116 = vpow.pop %v115
    %v117 = vmul.f32 %v114, 1.442695
    %v118 = vpow.pop %v117
    %v119 = vadd.f32 %v116, 1.0
    %v120 = vadd.f32 %v118, 1.0
    %v121 = vrcp.pop %v119
    %v122 = vmul.f32 1.0, %v121
    %v123 = vrcp.pop %v120
    %v124 = vmul.f32 1.0, %v123
    %126 = vset.pattern.permute.xlu0 0
    %127 = vperm.xlu0 %126, %v46
    %v128 = vpop.permute.xlu0 %127
    %131 = vset.pattern.permute.xlu0 0
    %132 = vperm.xlu0 %131, %v47
    %v133 = vpop.permute.xlu0 %132
    %v135 = vmul.f32 %v122, %v128
    %v136 = vmul.f32 %v124, %v133
    %v137 = vld [vmem:[#allocation2] sm:$0xf]
    %v138 = vld [vmem:[#allocation2 + $0x4] sm:$0xf]
    %v139 = vld [vmem:[#allocation2 + $0x8] sm:$0xf]
    %v140 = vld [vmem:[#allocation2 + $0xc] sm:$0xf]
    %v141 = vld [vmem:[#allocation2 + $0x10] sm:$0xf]
    %v142 = vld [vmem:[#allocation2 + $0x14] sm:$0xf]
    %v143 = vld [vmem:[#allocation2 + $0x18] sm:$0xf]
    %v144 = vld [vmem:[#allocation2 + $0x1c] sm:$0xf]
    %v145 = vld [vmem:[#allocation2 + $0x20] sm:$0xf]
    %v146 = vld [vmem:[#allocation2 + $0x24] sm:$0xf]
    %v147 = vld [vmem:[#allocation2 + $0x28] sm:$0xf]
    %v148 = vld [vmem:[#allocation2 + $0x2c] sm:$0xf]
    %v149 = vld [vmem:[#allocation2 + $0x30] sm:$0xf]
    %v150 = vld [vmem:[#allocation2 + $0x34] sm:$0xf]
    %v151 = vld [vmem:[#allocation2 + $0x38] sm:$0xf]
    %v152 = vld [vmem:[#allocation2 + $0x3c] sm:$0xf]
    %v153 = vld [vmem:[%s5] sm:$0x1]
    %v154 = vpack.c.bf16 %v136, %v135
    %v156 = vlaneseq
    %v157 = vshrl.u32 %v156, 7
    %v158 = vsub.s32 0, %v157
    %v159 = vrot.slane %v153, %v158
    %v177 = vunpack.c.l.b16 %v137
    %v178 = vunpack.c.l.b16 %v138
    %v179 = vunpack.c.l.b16 %v139
    %v180 = vunpack.c.l.b16 %v140
    %v181 = vunpack.c.l.b16 %v141
    %v182 = vunpack.c.l.b16 %v142
    %v183 = vunpack.c.l.b16 %v143
    %v184 = vunpack.c.l.b16 %v144
    %v185 = vunpack.c.l.b16 %v145
    %v186 = vunpack.c.l.b16 %v146
    %v187 = vunpack.c.l.b16 %v147
    %v188 = vunpack.c.l.b16 %v148
    %v189 = vunpack.c.l.b16 %v149
    %v190 = vunpack.c.l.b16 %v150
    %v191 = vunpack.c.l.b16 %v151
    %v192 = vunpack.c.l.b16 %v152
    %v193 = vpack.c.b16 %v178, %v177
    %v194 = vpack.c.b16 %v180, %v179
    %v195 = vpack.c.b16 %v182, %v181
    %v196 = vpack.c.b16 %v184, %v183
    %v197 = vpack.c.b16 %v186, %v185
    %v198 = vpack.c.b16 %v188, %v187
    %v199 = vpack.c.b16 %v190, %v189
    %v200 = vpack.c.b16 %v192, %v191
    %209 = vmatprep.subr.bf16.mxu0 0
    %210 = vmatpush1.bf16.msra.mxu0 %v193
    %211 = vmatprep.subr.bf16.mxu0 0
    %212 = vmatpush1.bf16.msra.mxu0 %v194
    %213 = vmatprep.subr.bf16.mxu0 0
    %214 = vmatpush1.bf16.msra.mxu0 %v195
    %215 = vmatprep.subr.bf16.mxu0 0
    %216 = vmatpush1.bf16.msra.mxu0 %v196
    %217 = vmatprep.subr.bf16.mxu0 0
    %218 = vmatpush1.bf16.msra.mxu0 %v197
    %219 = vmatprep.subr.bf16.mxu0 0
    %220 = vmatpush1.bf16.msra.mxu0 %v198
    %221 = vmatprep.subr.bf16.mxu0 0
    %222 = vmatpush1.bf16.msra.mxu0 %v199
    %223 = vmatprep.subr.bf16.mxu0 0
    %224 = vmatpush1.bf16.msra.mxu0 %v200
    %225 = vmatprep.subr.bf16.mxu0 0
    %226 = vmatpush1.bf16.msra.mxu0 0
    %227 = vmatprep.subr.bf16.mxu0 0
    %228 = vmatpush1.bf16.msra.mxu0 0
    %229 = vmatprep.subr.bf16.mxu0 0
    %230 = vmatpush1.bf16.msra.mxu0 0
    %231 = vmatprep.subr.bf16.mxu0 0
    %232 = vmatpush1.bf16.msra.mxu0 0
    %233 = vmatprep.subr.bf16.mxu0 0
    %234 = vmatpush1.bf16.msra.mxu0 0
    %235 = vmatprep.subr.bf16.mxu0 0
    %236 = vmatpush1.bf16.msra.mxu0 0
    %237 = vmatprep.subr.bf16.mxu0 0
    %238 = vmatpush1.bf16.msra.mxu0 0
    %239 = vmatprep.subr.bf16.mxu0 0
    %240 = vmatpush1.bf16.msra.mxu0 0
    %241 = vmatprep.mubr.bf16.mxu0 0
    %242 = vmatmul.mubr.bf16.gmra.mrb[0].mxu0 %v154
    %v243 = vpop.f32.mrb[0].mxu0
    %v244 = vadd.f32 %v159, %v243
    %v245 = vpop.f32.mrb[0].mxu0
    %v246 = vpop.f32.mrb[0].mxu0
    %v247 = vadd.f32 %v159, %v246
    %v248 = vpop.f32.mrb[0].mxu0
    %249 = vdwg.mxu0
    %vm250 = vcmask 7168
    %251 = vst.msk [vmem:[%s6] sm:$0xff] %vm250, %v244
    %252 = vst.msk [vmem:[%s6 + $0x8] sm:$0xff] %vm250, %v247
    // Predicated region
    $region30: #{tpu_custom_call.1} parent=1 // pred_check
      _
    $region31: #{tpu_custom_call.1} parent=1 // pred_check_branch
      %254 = sbr.rel (0) target = $region33
    $region32: #{tpu_custom_call.1} parent=1 // pred_region
      _
    $region33: #{tpu_custom_call.1} parent=1 // pred_fallthru
      _
    // Predicated region
    $region34: #{tpu_custom_call.1} parent=1 // pred_check
      _
    $region35: #{tpu_custom_call.1} parent=1 // pred_check_branch
      %256 = sbr.rel (0) target = $region37
    $region36: #{tpu_custom_call.1} parent=1 // pred_region
      _
    $region37: #{tpu_custom_call.1} parent=1 // pred_fallthru
      _
    %257 = vsyncpa [#allocation3], 1

</llo_original>
